<compile_context>
chip_gen: v6e
topology: v6e:2x2x1
jax: 0.10.0
libtpu: 0.0.40
codegen_flags: <defaults>
</compile_context>

<pallas_src>
import jax
import jax.numpy as jnp
from jax.experimental import pallas as pl
from jax.experimental.pallas import tpu as pltpu

# ------------------------- model configuration -------------------------
STATE = 16
NUM_ACTIONS = 4
H0, H1 = 32, 32                                # layers_features

OUT_DIM = STATE + 2                            # 18  (head | is_terminal | certainty)
LANES = max(H0, H1, OUT_DIM)                   # 32  (lane width of the param slab)

# Row offsets inside the single packed parameter slab (PROWS, LANES):
R_W0S = 0                                      # rows [0, 16)  : W0 state rows
R_W0A = R_W0S + STATE                          # rows [16, 20) : W0 action rows (rows 20..23 zero)
R_W1 = 24                                      # rows [24, 56) : W1
R_WH = R_W1 + H0                               # rows [56, 88) : [Wh | 5*Wt | Wc | 0]
R_B0 = R_WH + H1                               # row 88        : b0
R_B1 = R_B0 + 1                                # row 89        : b1
R_BH = R_B1 + 1                                # row 90        : [bh | 5*bt | bc | 0]
PROWS = ((R_BH + 1 + 7) // 8) * 8              # 96


# ------------------------------ kernel ---------------------------------
def _stm_kernel(s_ref, a_ref, p_ref, out_ref):
    s = s_ref[...]                                       # (tb, STATE)       f32
    a = a_ref[...]                                       # (tb, NUM_ACTIONS) f32

    # Static, sublane-aligned slices of the packed parameter slab (free).
    w0s = p_ref[R_W0S:R_W0S + STATE, :H0]                # (16, H0)
    w1 = p_ref[R_W1:R_W1 + H0, :H1]                      # (H0, H1)
    wh = p_ref[R_WH:R_WH + H1, :]                        # (H1, LANES) = [Wh | 5Wt | Wc | 0]
    b0 = p_ref[R_B0:R_B0 + 1, :H0]                       # (1, H0)
    b1 = p_ref[R_B1:R_B1 + 1, :H1]                       # (1, H1)
    bh = p_ref[R_BH:R_BH + 1, :]                         # (1, LANES)

    # ---- hidden_layer_0: state part on the MXU, action part as 4 rank-1 VPU
    #      updates (exactly concat(state, action) @ W0, no concat needed).
    h = jnp.dot(s, w0s, preferred_element_type=jnp.float32) + b0
    for j in range(NUM_ACTIONS):                         # statically unrolled
        h = h + a[:, j:j + 1] * p_ref[R_W0A + j:R_W0A + j + 1, :H0]
    h = jnp.maximum(h, 0.0)

    # ---- hidden_layer_1 (+ relu)
    h = jnp.maximum(jnp.dot(h, w1, preferred_element_type=jnp.float32) + b1, 0.0)

    # ---- fused heads: one matmul -> [head | 5*term_logit | cert_logit | 0]
    z = jnp.dot(h, wh, preferred_element_type=jnp.float32) + bh     # (tb, LANES)

    # Pass-through mask built from a single-row iota (broadcast along sublanes).
    col = jax.lax.broadcasted_iota(jnp.int32, (1, LANES), 1)        # (1, LANES)
    y = jnp.where(col < STATE, z, jax.nn.sigmoid(z))                # (tb, LANES)

    out_ref[...] = y[:, :OUT_DIM]                                   # drop dead pad columns


# ------------------------------ wrapper ---------------------------------
def state_transition_forward(state, action, param_slab, *, block_b=2048):
    """state: (B, STATE), action: (B, NUM_ACTIONS), param_slab: (PROWS, LANES).

    Returns (head, is_terminal, certainty) with the module's semantics.
    """
    B = state.shape[0]
    s = state.reshape(B, -1).astype(jnp.float32)         # state.flatten(start_dim=1).float()
    a = action.reshape(B, -1).astype(jnp.float32)        # action.flatten(start_dim=1).float()

    # Batch tile: scales with B, capped at block_b (default 2048: ~6 MiB of
    # double-buffered VMEM with the lane-padded layout -> safe on v5e/v6e/v7x
    # default scoped-VMEM limits while amortizing per-grid-step overhead).
    tb = min(block_b, B)
    if tb < B and tb % 8 != 0:
        tb = ((tb + 7) // 8) * 8                          # sublane-align partial tiles
    b_pad = ((B + tb - 1) // tb) * tb
    if b_pad != B:                                        # robust to B % tb != 0
        s = jnp.pad(s, ((0, b_pad - B), (0, 0)))
        a = jnp.pad(a, ((0, b_pad - B), (0, 0)))

    out = pl.pallas_call(
        _stm_kernel,
        out_shape=jax.ShapeDtypeStruct((b_pad, OUT_DIM), jnp.float32),
        grid_spec=pltpu.PrefetchScalarGridSpec(
            num_scalar_prefetch=0,
            grid=(b_pad // tb,),
            in_specs=[
                pl.BlockSpec((tb, STATE), lambda i: (i, 0)),        # state (tiled on batch)
                pl.BlockSpec((tb, NUM_ACTIONS), lambda i: (i, 0)),  # action (tiled on batch)
                pl.BlockSpec((PROWS, LANES), lambda i: (0, 0)),     # packed params (resident)
            ],
            out_specs=pl.BlockSpec((tb, OUT_DIM), lambda i: (i, 0)),
        ),
        compiler_params=pltpu.CompilerParams(
            dimension_semantics=("parallel",)),                     # shard batch across TCs (v7x)
    )(s, a, param_slab)

    head = out[:B, :STATE].reshape(state.shape)           # head.view(state.shape)
    is_terminal = out[:B, STATE:STATE + 1]
    certainty = out[:B, STATE + 1:OUT_DIM]
    return head, is_terminal, certainty


# --------------------- deterministic parameter init --------------------
def _linear_params(key, fan_in, fan_out):
    # mimic nn.Linear default: U(-1/sqrt(fan_in), 1/sqrt(fan_in)); stored as (in, out)
    kw, kb = jax.random.split(key)
    bound = 1.0 / jnp.sqrt(jnp.float32(fan_in))
    w = jax.random.uniform(kw, (fan_in, fan_out), jnp.float32, -bound, bound)
    b = jax.random.uniform(kb, (1, fan_out), jnp.float32, -bound, bound)
    return w, b


def make_params(key):
    keys = jax.random.split(key, 5)
    w0, b0 = _linear_params(keys[0], STATE + NUM_ACTIONS, H0)   # hidden_layer_0
    w1, b1 = _linear_params(keys[1], H0, H1)                    # hidden_layer_1
    wh, bh = _linear_params(keys[2], H1, STATE)                 # head
    wt, bt = _linear_params(keys[3], H1, 1)                     # is_terminal
    wc, bc = _linear_params(keys[4], H1, 1)                     # certainty
    return dict(w0=w0, b0=b0, w1=w1, b1=b1, wh=wh, bh=bh,
                wt=wt, bt=bt, wc=wc, bc=bc)


def pack_params(p):
    """Pack all weights + biases into one f32 slab (PROWS, LANES); done once host-side.

    The 5x is_terminal scale is folded into the packed weights:
    sigmoid(5*(x@Wt + bt)) == sigmoid(x@(5*Wt) + 5*bt).
    """
    slab = jnp.zeros((PROWS, LANES), jnp.float32)
    slab = slab.at[R_W0S:R_W0S + STATE, :H0].set(p["w0"][:STATE])
    slab = slab.at[R_W0A:R_W0A + NUM_ACTIONS, :H0].set(p["w0"][STATE:])
    slab = slab.at[R_W1:R_W1 + H0, :H1].set(p["w1"])
    slab = slab.at[R_WH:R_WH + H1, :STATE].set(p["wh"])
    slab = slab.at[R_WH:R_WH + H1, STATE:STATE + 1].set(5.0 * p["wt"])
    slab = slab.at[R_WH:R_WH + H1, STATE + 1:STATE + 2].set(p["wc"])
    slab = slab.at[R_B0, :H0].set(p["b0"].reshape(-1))
    slab = slab.at[R_B1, :H1].set(p["b1"].reshape(-1))
    slab = slab.at[R_BH, :STATE].set(p["bh"].reshape(-1))
    slab = slab.at[R_BH, STATE].set(5.0 * p["bt"][0, 0])
    slab = slab.at[R_BH, STATE + 1].set(p["bc"][0, 0])
    return slab


# ------------------------- pure-JAX reference ---------------------------
def _reference(state, action, p):
    x = jnp.concatenate([state, action], axis=1)
    x = jnp.maximum(x @ p["w0"] + p["b0"], 0.0)
    x = jnp.maximum(x @ p["w1"] + p["b1"], 0.0)
    head = x @ p["wh"] + p["bh"]
    term = jax.nn.sigmoid(5.0 * (x @ p["wt"] + p["bt"]))
    cert = jax.nn.sigmoid(x @ p["wc"] + p["bc"])
    return head.reshape(state.shape), term, cert


if __name__ == "__main__":
    B = 8
    key = jax.random.PRNGKey(0)
    k_state, k_action, k_param = jax.random.split(key, 3)

    state = jax.random.normal(k_state, (B, STATE), jnp.float32)
    action_idx = jax.random.randint(k_action, (B,), 0, NUM_ACTIONS)
    action = jax.nn.one_hot(action_idx, NUM_ACTIONS, dtype=jnp.float32)

    params = make_params(k_param)
    slab = pack_params(params)

    head, is_terminal, certainty = jax.block_until_ready(
        state_transition_forward(state, action, slab))

    ref_head, ref_term, ref_cert = _reference(state, action, params)
    assert head.shape == state.shape
    assert is_terminal.shape == (B, 1) and certainty.shape == (B, 1)
    assert jnp.allclose(head, ref_head, atol=1e-5, rtol=1e-5)
    assert jnp.allclose(is_terminal, ref_term, atol=1e-5, rtol=1e-5)
    assert jnp.allclose(certainty, ref_cert, atol=1e-5, rtol=1e-5)

    print("KERNEL_OK")
</pallas_src>

<mosaic_0001>
module attributes {stable_mosaic.version = 11 : i64} {
  func.func @_stm_kernel(%arg0: i32, %arg1: memref<8x16xf32, #tpu.memory_space<vmem>>, %arg2: memref<8x4xf32, #tpu.memory_space<vmem>>, %arg3: memref<96x32xf32, #tpu.memory_space<vmem>>, %arg4: memref<8x18xf32, #tpu.memory_space<vmem>>) attributes {dimension_semantics = [#tpu.dimension_semantics<parallel>], iteration_bounds = array<i64: 1>, scalar_prefetch = 0 : i64, scratch_operands = 0 : i64, tpu.core_type = #tpu.core_type<tc>, window_params = [{transform_indices = @transform_0, window_bounds = array<i64: 8, 16>}, {transform_indices = @transform_1, window_bounds = array<i64: 8, 4>}, {pipeline_mode = #tpu.pipeline_mode<synchronous>, transform_indices = @transform_2, window_bounds = array<i64: 96, 32>}, {transform_indices = @transform_3, window_bounds = array<i64: 8, 18>}]} {
    %c0 = arith.constant 0 : index
    %c0_0 = arith.constant 0 : index
    %0 = vector.load %arg1[%c0, %c0_0] : memref<8x16xf32, #tpu.memory_space<vmem>>, vector<8x16xf32>
    %c0_1 = arith.constant 0 : index
    %c0_2 = arith.constant 0 : index
    %1 = vector.load %arg2[%c0_1, %c0_2] : memref<8x4xf32, #tpu.memory_space<vmem>>, vector<8x4xf32>
    %c0_3 = arith.constant 0 : index
    %c0_4 = arith.constant 0 : index
    %2 = vector.load %arg3[%c0_3, %c0_4] : memref<96x32xf32, #tpu.memory_space<vmem>>, vector<16x32xf32>
    %c24 = arith.constant 24 : index
    %c0_5 = arith.constant 0 : index
    %3 = vector.load %arg3[%c24, %c0_5] : memref<96x32xf32, #tpu.memory_space<vmem>>, vector<32x32xf32>
    %c56 = arith.constant 56 : index
    %c0_6 = arith.constant 0 : index
    %4 = vector.load %arg3[%c56, %c0_6] : memref<96x32xf32, #tpu.memory_space<vmem>>, vector<32x32xf32>
    %c88 = arith.constant 88 : index
    %c0_7 = arith.constant 0 : index
    %5 = vector.load %arg3[%c88, %c0_7] : memref<96x32xf32, #tpu.memory_space<vmem>>, vector<1x32xf32>
    %c89 = arith.constant 89 : index
    %c0_8 = arith.constant 0 : index
    %6 = vector.load %arg3[%c89, %c0_8] : memref<96x32xf32, #tpu.memory_space<vmem>>, vector<1x32xf32>
    %c90 = arith.constant 90 : index
    %c0_9 = arith.constant 0 : index
    %7 = vector.load %arg3[%c90, %c0_9] : memref<96x32xf32, #tpu.memory_space<vmem>>, vector<1x32xf32>
    %cst = arith.constant dense<0.000000e+00> : vector<8x32xf32>
    %8 = tpu.matmul %0, %2, %cst {dimension_numbers = #tpu.dot_dimension_numbers<[1], [0], [0], [1], [0, 0, 1, 1], [], []>} : vector<8x16xf32>, vector<16x32xf32>, vector<8x32xf32> -> vector<8x32xf32>
    %9 = vector.broadcast %5 : vector<1x32xf32> to vector<8x32xf32>
    %10 = arith.addf %8, %9 : vector<8x32xf32>
    %11 = vector.extract_strided_slice %1 {offsets = [0, 0], sizes = [8, 1], strides = [1, 1]} : vector<8x4xf32> to vector<8x1xf32>
    %c16 = arith.constant 16 : index
    %c0_10 = arith.constant 0 : index
    %12 = vector.load %arg3[%c16, %c0_10] : memref<96x32xf32, #tpu.memory_space<vmem>>, vector<1x32xf32>
    %13 = vector.broadcast %11 : vector<8x1xf32> to vector<8x32xf32>
    %14 = vector.broadcast %12 : vector<1x32xf32> to vector<8x32xf32>
    %15 = arith.mulf %13, %14 : vector<8x32xf32>
    %16 = arith.addf %10, %15 : vector<8x32xf32>
    %17 = vector.extract_strided_slice %1 {offsets = [0, 1], sizes = [8, 1], strides = [1, 1]} : vector<8x4xf32> to vector<8x1xf32>
    %c17 = arith.constant 17 : index
    %c0_11 = arith.constant 0 : index
    %18 = vector.load %arg3[%c17, %c0_11] : memref<96x32xf32, #tpu.memory_space<vmem>>, vector<1x32xf32>
    %19 = vector.broadcast %17 : vector<8x1xf32> to vector<8x32xf32>
    %20 = vector.broadcast %18 : vector<1x32xf32> to vector<8x32xf32>
    %21 = arith.mulf %19, %20 : vector<8x32xf32>
    %22 = arith.addf %16, %21 : vector<8x32xf32>
    %23 = vector.extract_strided_slice %1 {offsets = [0, 2], sizes = [8, 1], strides = [1, 1]} : vector<8x4xf32> to vector<8x1xf32>
    %c18 = arith.constant 18 : index
    %c0_12 = arith.constant 0 : index
    %24 = vector.load %arg3[%c18, %c0_12] : memref<96x32xf32, #tpu.memory_space<vmem>>, vector<1x32xf32>
    %25 = vector.broadcast %23 : vector<8x1xf32> to vector<8x32xf32>
    %26 = vector.broadcast %24 : vector<1x32xf32> to vector<8x32xf32>
    %27 = arith.mulf %25, %26 : vector<8x32xf32>
    %28 = arith.addf %22, %27 : vector<8x32xf32>
    %29 = vector.extract_strided_slice %1 {offsets = [0, 3], sizes = [8, 1], strides = [1, 1]} : vector<8x4xf32> to vector<8x1xf32>
    %c19 = arith.constant 19 : index
    %c0_13 = arith.constant 0 : index
    %30 = vector.load %arg3[%c19, %c0_13] : memref<96x32xf32, #tpu.memory_space<vmem>>, vector<1x32xf32>
    %31 = vector.broadcast %29 : vector<8x1xf32> to vector<8x32xf32>
    %32 = vector.broadcast %30 : vector<1x32xf32> to vector<8x32xf32>
    %33 = arith.mulf %31, %32 : vector<8x32xf32>
    %34 = arith.addf %28, %33 : vector<8x32xf32>
    %cst_14 = arith.constant 0.000000e+00 : f32
    %35 = vector.broadcast %cst_14 : f32 to vector<8x32xf32>
    %36 = arith.maximumf %34, %35 : vector<8x32xf32>
    %cst_15 = arith.constant dense<0.000000e+00> : vector<8x32xf32>
    %37 = tpu.matmul %36, %3, %cst_15 {dimension_numbers = #tpu.dot_dimension_numbers<[1], [0], [0], [1], [0, 0, 1, 1], [], []>} : vector<8x32xf32>, vector<32x32xf32>, vector<8x32xf32> -> vector<8x32xf32>
    %38 = vector.broadcast %6 : vector<1x32xf32> to vector<8x32xf32>
    %39 = arith.addf %37, %38 : vector<8x32xf32>
    %cst_16 = arith.constant 0.000000e+00 : f32
    %40 = vector.broadcast %cst_16 : f32 to vector<8x32xf32>
    %41 = arith.maximumf %39, %40 : vector<8x32xf32>
    %cst_17 = arith.constant dense<0.000000e+00> : vector<8x32xf32>
    %42 = tpu.matmul %41, %4, %cst_17 {dimension_numbers = #tpu.dot_dimension_numbers<[1], [0], [0], [1], [0, 0, 1, 1], [], []>} : vector<8x32xf32>, vector<32x32xf32>, vector<8x32xf32> -> vector<8x32xf32>
    %43 = vector.broadcast %7 : vector<1x32xf32> to vector<8x32xf32>
    %44 = arith.addf %42, %43 : vector<8x32xf32>
    %45 = tpu.iota {dimensions = array<i32: 1>} : vector<1x32xi32>
    %c16_i32 = arith.constant 16 : i32
    %46 = vector.broadcast %c16_i32 : i32 to vector<1x32xi32>
    %47 = arith.cmpi slt, %45, %46 : vector<1x32xi32>
    %48 = arith.negf %44 : vector<8x32xf32>
    %49 = math.exp %48 : vector<8x32xf32>
    %cst_18 = arith.constant 1.000000e+00 : f32
    %50 = vector.broadcast %cst_18 : f32 to vector<8x32xf32>
    %51 = arith.addf %50, %49 : vector<8x32xf32>
    %52 = arith.divf %50, %51 : vector<8x32xf32>
    %53 = vector.shape_cast %47 : vector<1x32xi1> to vector<1x32xi1>
    %54 = vector.broadcast %53 : vector<1x32xi1> to vector<8x32xi1>
    %55 = arith.select %54, %44, %52 : vector<8x32xi1>, vector<8x32xf32>
    %56 = vector.extract_strided_slice %55 {offsets = [0, 0], sizes = [8, 18], strides = [1, 1]} : vector<8x32xf32> to vector<8x18xf32>
    %c0_19 = arith.constant 0 : index
    %c0_20 = arith.constant 0 : index
    %57 = vector.load %arg4[%c0_19, %c0_20] : memref<8x18xf32, #tpu.memory_space<vmem>>, vector<8x18xf32>
    tpu.vector_store %arg4[%c0_19, %c0_20], %56 {strides = array<i32>} : memref<8x18xf32, #tpu.memory_space<vmem>>, vector<8x18xf32>,
    return
  }
  func.func @transform_0(%arg0: i32) -> (i32, i32) {
    %c0_i32 = arith.constant 0 : i32
    %c0_i32_0 = arith.constant 0 : i32
    return %arg0, %c0_i32 : i32, i32
  }
  func.func @transform_1(%arg0: i32) -> (i32, i32) {
    %c0_i32 = arith.constant 0 : i32
    %c0_i32_0 = arith.constant 0 : i32
    return %arg0, %c0_i32 : i32, i32
  }
  func.func @transform_2(%arg0: i32) -> (i32, i32) {
    %c0_i32 = arith.constant 0 : i32
    %c0_i32_0 = arith.constant 0 : i32
    %c0_i32_1 = arith.constant 0 : i32
    return %c0_i32, %c0_i32_0 : i32, i32
  }
  func.func @transform_3(%arg0: i32) -> (i32, i32) {
    %c0_i32 = arith.constant 0 : i32
    %c0_i32_0 = arith.constant 0 : i32
    return %arg0, %c0_i32 : i32, i32
  }
}

</mosaic_0001>

<llo_original>
// kernel: tpu_custom_call.1
$region0: #{tpu_custom_call.1}
  #allocation0 [shape = 'u32[]', space=smem, size = 0x4, offset = 0x4, fixed_abs, tag = 'smem constant byte address 0x4 - core index']
  #allocation1 [shape = 'u32[144,128]{1,0:T(1,128)}', space=vmem, size = 0x12000, scoped, tag = 'internal scratch']
  %s0 = inlined_call_operand.vmem [shape: f32[8,16], index: 0, kind: input, shape index: {}]
  %s1 = inlined_call_operand.vmem [shape: f32[8,4], index: 1, kind: input, shape index: {}]
  %s2 = inlined_call_operand.vmem [shape: f32[96,32], index: 2, kind: input, shape index: {}]
  %s3 = inlined_call_operand.hbm [shape: f32[8,18], index: 3, kind: output, shape index: {}]
  %s4 = sld [smem:[#allocation0]]
  $region22: #{tpu_custom_call.1} parent=0
    _
  %s6 = ssub.s32 1, %s4
  %s7 = scalar_select 0, %s6, %s4
  $region1: #{tpu_custom_call.1} parent=0
    #allocation2 [shape = 'u8[4096]{0}', space=vmem, size = 0x1000, scoped, tag = 'output window, operand 0, single buffered']
    #allocation3 [shape = 's32[1]{0}', space=sflag, size = 0x4, scoped, tag = 'scoped memory for tpu_custom_call.1']
    %8 = vsyncpa [#allocation3], 0
    // Predicated region
    $region2: #{tpu_custom_call.1} parent=1 // pred_check
      _
    $region3: #{tpu_custom_call.1} parent=1 // pred_check_branch
      %10 = sbr.rel (0) target = $region5
    $region4: #{tpu_custom_call.1} parent=1 // pred_region
      _
    $region5: #{tpu_custom_call.1} parent=1 // pred_fallthru
      _
    // Predicated region
    $region6: #{tpu_custom_call.1} parent=1 // pred_check
      _
    $region7: #{tpu_custom_call.1} parent=1 // pred_check_branch
      %12 = sbr.rel (0) target = $region9
    $region8: #{tpu_custom_call.1} parent=1 // pred_region
      _
    $region9: #{tpu_custom_call.1} parent=1 // pred_fallthru
      _
    // Predicated region
    $region10: #{tpu_custom_call.1} parent=1 // pred_check
      _
    $region11: #{tpu_custom_call.1} parent=1 // pred_check_branch
      %14 = sbr.rel (0) target = $region13
    $region12: #{tpu_custom_call.1} parent=1 // pred_region
      _
    $region13: #{tpu_custom_call.1} parent=1 // pred_fallthru
      _
    %v15 = vld [vmem:[%s0] sm:$0xff]
    %v16 = vld [vmem:[%s1] sm:$0xff]
    %v17 = vld [vmem:[%s2] sm:$0xff]
    %v18 = vld [vmem:[%s2 + $0x8] sm:$0xff]
    %v19 = vld [vmem:[%s2 + $0x18] sm:$0xff]
    %v20 = vld [vmem:[%s2 + $0x20] sm:$0xff]
    %v21 = vld [vmem:[%s2 + $0x28] sm:$0xff]
    %v22 = vld [vmem:[%s2 + $0x30] sm:$0xff]
    %v23 = vld [vmem:[%s2 + $0x38] sm:$0xff]
    %v24 = vld [vmem:[%s2 + $0x40] sm:$0xff]
    %v25 = vld [vmem:[%s2 + $0x48] sm:$0xff]
    %v26 = vld [vmem:[%s2 + $0x50] sm:$0xff]
    %v27 = vld [vmem:[%s2 + $0x58] sm:$0x1]
    %v28 = vld [vmem:[%s2 + $0x59] sm:$0x1]
    %v29 = vld [vmem:[%s2 + $0x5a] sm:$0x1]
    %v30 = vlaneseq
    %v31 = vshrl.u32 %v30, 7
    %v32 = vsub.s32 0, %v31
    %v33 = vrot.slane %v27, %v32
    %vm34 = vcmask 130048
    %v36 = vsel %vm34, %v15, 0
    %38 = vmatprep.subr.mxu0 0.0
    %39 = vmatpush1.msra.mxu0 0.0
    %40 = vmatprep.subr.mxu0 0.0
    %41 = vmatpush1.msra.mxu0 0.0
    %42 = vmatprep.subr.mxu0 0.0
    %43 = vmatpush1.msra.mxu0 0.0
    %44 = vmatprep.subr.mxu0 0.0
    %45 = vmatpush1.msra.mxu0 0.0
    %46 = vmatprep.subr.mxu0 0.0
    %47 = vmatpush1.msra.mxu0 0.0
    %48 = vmatprep.subr.mxu0 0.0
    %49 = vmatpush1.msra.mxu0 0.0
    %50 = vmatprep.subr.mxu0 0.0
    %51 = vmatpush1.msra.mxu0 0.0
    %52 = vmatprep.subr.mxu0 0.0
    %53 = vmatpush1.msra.mxu0 0.0
    %54 = vmatprep.subr.mxu0 0.0
    %55 = vmatpush1.msra.mxu0 0.0
    %56 = vmatprep.subr.mxu0 0.0
    %57 = vmatpush1.msra.mxu0 0.0
    %58 = vmatprep.subr.mxu0 0.0
    %59 = vmatpush1.msra.mxu0 0.0
    %60 = vmatprep.subr.mxu0 0.0
    %61 = vmatpush1.msra.mxu0 0.0
    %62 = vmatprep.subr.mxu0 0.0
    %63 = vmatpush1.msra.mxu0 0.0
    %64 = vmatprep.subr.mxu0 0.0
    %65 = vmatpush1.msra.mxu0 0.0
    %66 = vmatprep.subr.mxu0 0.0
    %67 = vmatpush1.msra.mxu0 %v18
    %68 = vmatprep.subr.mxu0 0.0
    %69 = vmatpush1.msra.mxu0 %v17
    %70 = vmatprep.subr.mxu0 0.0
    %71 = vmatpush2.msra.mxu0 0.0
    %72 = vmatprep.subr.mxu0 0.0
    %73 = vmatpush2.msra.mxu0 0.0
    %74 = vmatprep.subr.mxu0 0.0
    %75 = vmatpush2.msra.mxu0 0.0
    %76 = vmatprep.subr.mxu0 0.0
    %77 = vmatpush2.msra.mxu0 0.0
    %78 = vmatprep.subr.mxu0 0.0
    %79 = vmatpush2.msra.mxu0 0.0
    %80 = vmatprep.subr.mxu0 0.0
    %81 = vmatpush2.msra.mxu0 0.0
    %82 = vmatprep.subr.mxu0 0.0
    %83 = vmatpush2.msra.mxu0 0.0
    %84 = vmatprep.subr.mxu0 0.0
    %85 = vmatpush2.msra.mxu0 0.0
    %86 = vmatprep.subr.mxu0 0.0
    %87 = vmatpush2.msra.mxu0 0.0
    %88 = vmatprep.subr.mxu0 0.0
    %89 = vmatpush2.msra.mxu0 0.0
    %90 = vmatprep.subr.mxu0 0.0
    %91 = vmatpush2.msra.mxu0 0.0
    %92 = vmatprep.subr.mxu0 0.0
    %93 = vmatpush2.msra.mxu0 0.0
    %94 = vmatprep.subr.mxu0 0.0
    %95 = vmatpush2.msra.mxu0 0.0
    %96 = vmatprep.subr.mxu0 0.0
    %97 = vmatpush2.msra.mxu0 0.0
    %98 = vmatprep.subr.mxu0 0.0
    %99 = vmatpush2.msra.mxu0 0.0
    %100 = vmatprep.subr.mxu0 0.0
    %101 = vmatpush2.msra.mxu0 0.0
    %102 = vmatprep.mubr.f32.mxu0 0.0
    %103 = vmatmul.mubr.f32.gmra.mxu0 %v36
    %v104 = vpop.f32.mrf.mxu0
    %v105 = vadd.f32 %v33, %v104
    %v106 = vpop.f32.mrf.mxu0
    %107 = vdwg.mxu0
    %v108 = vld [vmem:[%s2 + $0x10] sm:$0x1]
    %110 = vset.pattern.permute.xlu0 0
    %111 = vperm.xlu0 %110, %v16
    %v112 = vpop.permute.xlu0 %111
    %v114 = vlaneseq
    %v115 = vshrl.u32 %v114, 7
    %v116 = vsub.s32 0, %v115
    %v117 = vrot.slane %v108, %v116
    %v118 = vmul.f32 %v112, %v117
    %v119 = vadd.f32 %v105, %v118
    %v120 = vld [vmem:[%s2 + $0x11] sm:$0x1]
    %121 = vset.pattern.permute.xlu0 1
    %122 = vperm.xlu0 %121, %v16
    %v123 = vpop.permute.xlu0 %122
    %v125 = vlaneseq
    %v126 = vshrl.u32 %v125, 7
    %v127 = vsub.s32 0, %v126
    %v128 = vrot.slane %v120, %v127
    %v129 = vmul.f32 %v123, %v128
    %v130 = vadd.f32 %v119, %v129
    %v131 = vld [vmem:[%s2 + $0x12] sm:$0x1]
    %132 = vset.pattern.permute.xlu0 2
    %133 = vperm.xlu0 %132, %v16
    %v134 = vpop.permute.xlu0 %133
    %v136 = vlaneseq
    %v137 = vshrl.u32 %v136, 7
    %v138 = vsub.s32 0, %v137
    %v139 = vrot.slane %v131, %v138
    %v140 = vmul.f32 %v134, %v139
    %v141 = vadd.f32 %v130, %v140
    %v142 = vld [vmem:[%s2 + $0x13] sm:$0x1]
    %143 = vset.pattern.permute.xlu0 3
    %144 = vperm.xlu0 %143, %v16
    %v145 = vpop.permute.xlu0 %144
    %v147 = vlaneseq
    %v148 = vshrl.u32 %v147, 7
    %v149 = vsub.s32 0, %v148
    %v150 = vrot.slane %v142, %v149
    %v151 = vmul.f32 %v145, %v150
    %v152 = vadd.f32 %v141, %v151
    %v153 = vmax.f32 %v152, 0.0
    %v154 = vlaneseq
    %v155 = vshrl.u32 %v154, 7
    %v156 = vsub.s32 0, %v155
    %v157 = vrot.slane %v28, %v156
    %vm158 = vcmask 261120
    %v160 = vsel %vm158, %v153, 0
    %162 = vmatprep.subr.mxu0 0.0
    %163 = vmatpush1.msra.mxu0 0.0
    %164 = vmatprep.subr.mxu0 0.0
    %165 = vmatpush1.msra.mxu0 0.0
    %166 = vmatprep.subr.mxu0 0.0
    %167 = vmatpush1.msra.mxu0 0.0
    %168 = vmatprep.subr.mxu0 0.0
    %169 = vmatpush1.msra.mxu0 0.0
    %170 = vmatprep.subr.mxu0 0.0
    %171 = vmatpush1.msra.mxu0 0.0
    %172 = vmatprep.subr.mxu0 0.0
    %173 = vmatpush1.msra.mxu0 0.0
    %174 = vmatprep.subr.mxu0 0.0
    %175 = vmatpush1.msra.mxu0 0.0
    %176 = vmatprep.subr.mxu0 0.0
    %177 = vmatpush1.msra.mxu0 0.0
    %178 = vmatprep.subr.mxu0 0.0
    %179 = vmatpush1.msra.mxu0 0.0
    %180 = vmatprep.subr.mxu0 0.0
    %181 = vmatpush1.msra.mxu0 0.0
    %182 = vmatprep.subr.mxu0 0.0
    %183 = vmatpush1.msra.mxu0 0.0
    %184 = vmatprep.subr.mxu0 0.0
    %185 = vmatpush1.msra.mxu0 0.0
    %186 = vmatprep.subr.mxu0 0.0
    %187 = vmatpush1.msra.mxu0 %v22
    %188 = vmatprep.subr.mxu0 0.0
    %189 = vmatpush1.msra.mxu0 %v21
    %190 = vmatprep.subr.mxu0 0.0
    %191 = vmatpush1.msra.mxu0 %v20
    %192 = vmatprep.subr.mxu0 0.0
    %193 = vmatpush1.msra.mxu0 %v19
    %194 = vmatprep.subr.mxu0 0.0
    %195 = vmatpush2.msra.mxu0 0.0
    %196 = vmatprep.subr.mxu0 0.0
    %197 = vmatpush2.msra.mxu0 0.0
    %198 = vmatprep.subr.mxu0 0.0
    %199 = vmatpush2.msra.mxu0 0.0
    %200 = vmatprep.subr.mxu0 0.0
    %201 = vmatpush2.msra.mxu0 0.0
    %202 = vmatprep.subr.mxu0 0.0
    %203 = vmatpush2.msra.mxu0 0.0
    %204 = vmatprep.subr.mxu0 0.0
    %205 = vmatpush2.msra.mxu0 0.0
    %206 = vmatprep.subr.mxu0 0.0
    %207 = vmatpush2.msra.mxu0 0.0
    %208 = vmatprep.subr.mxu0 0.0
    %209 = vmatpush2.msra.mxu0 0.0
    %210 = vmatprep.subr.mxu0 0.0
    %211 = vmatpush2.msra.mxu0 0.0
    %212 = vmatprep.subr.mxu0 0.0
    %213 = vmatpush2.msra.mxu0 0.0
    %214 = vmatprep.subr.mxu0 0.0
    %215 = vmatpush2.msra.mxu0 0.0
    %216 = vmatprep.subr.mxu0 0.0
    %217 = vmatpush2.msra.mxu0 0.0
    %218 = vmatprep.subr.mxu0 0.0
    %219 = vmatpush2.msra.mxu0 0.0
    %220 = vmatprep.subr.mxu0 0.0
    %221 = vmatpush2.msra.mxu0 0.0
    %222 = vmatprep.subr.mxu0 0.0
    %223 = vmatpush2.msra.mxu0 0.0
    %224 = vmatprep.subr.mxu0 0.0
    %225 = vmatpush2.msra.mxu0 0.0
    %226 = vmatprep.mubr.f32.mxu0 0.0
    %227 = vmatmul.mubr.f32.gmra.mxu0 %v160
    %v228 = vpop.f32.mrf.mxu0
    %v229 = vadd.f32 %v157, %v228
    %v230 = vpop.f32.mrf.mxu0
    %231 = vdwg.mxu0
    %v232 = vmax.f32 %v229, 0.0
    %v233 = vlaneseq
    %v234 = vshrl.u32 %v233, 7
    %v235 = vsub.s32 0, %v234
    %v236 = vrot.slane %v29, %v235
    %v238 = vsel %vm158, %v232, 0
    %240 = vmatprep.subr.mxu0 0.0
    %241 = vmatpush1.msra.mxu0 0.0
    %242 = vmatprep.subr.mxu0 0.0
    %243 = vmatpush1.msra.mxu0 0.0
    %244 = vmatprep.subr.mxu0 0.0
    %245 = vmatpush1.msra.mxu0 0.0
    %246 = vmatprep.subr.mxu0 0.0
    %247 = vmatpush1.msra.mxu0 0.0
    %248 = vmatprep.subr.mxu0 0.0
    %249 = vmatpush1.msra.mxu0 0.0
    %250 = vmatprep.subr.mxu0 0.0
    %251 = vmatpush1.msra.mxu0 0.0
    %252 = vmatprep.subr.mxu0 0.0
    %253 = vmatpush1.msra.mxu0 0.0
    %254 = vmatprep.subr.mxu0 0.0
    %255 = vmatpush1.msra.mxu0 0.0
    %256 = vmatprep.subr.mxu0 0.0
    %257 = vmatpush1.msra.mxu0 0.0
    %258 = vmatprep.subr.mxu0 0.0
    %259 = vmatpush1.msra.mxu0 0.0
    %260 = vmatprep.subr.mxu0 0.0
    %261 = vmatpush1.msra.mxu0 0.0
    %262 = vmatprep.subr.mxu0 0.0
    %263 = vmatpush1.msra.mxu0 0.0
    %264 = vmatprep.subr.mxu0 0.0
    %265 = vmatpush1.msra.mxu0 %v26
    %266 = vmatprep.subr.mxu0 0.0
    %267 = vmatpush1.msra.mxu0 %v25
    %268 = vmatprep.subr.mxu0 0.0
    %269 = vmatpush1.msra.mxu0 %v24
    %270 = vmatprep.subr.mxu0 0.0
    %271 = vmatpush1.msra.mxu0 %v23
    %272 = vmatprep.subr.mxu0 0.0
    %273 = vmatpush2.msra.mxu0 0.0
    %274 = vmatprep.subr.mxu0 0.0
    %275 = vmatpush2.msra.mxu0 0.0
    %276 = vmatprep.subr.mxu0 0.0
    %277 = vmatpush2.msra.mxu0 0.0
    %278 = vmatprep.subr.mxu0 0.0
    %279 = vmatpush2.msra.mxu0 0.0
    %280 = vmatprep.subr.mxu0 0.0
    %281 = vmatpush2.msra.mxu0 0.0
    %282 = vmatprep.subr.mxu0 0.0
    %283 = vmatpush2.msra.mxu0 0.0
    %284 = vmatprep.subr.mxu0 0.0
    %285 = vmatpush2.msra.mxu0 0.0
    %286 = vmatprep.subr.mxu0 0.0
    %287 = vmatpush2.msra.mxu0 0.0
    %288 = vmatprep.subr.mxu0 0.0
    %289 = vmatpush2.msra.mxu0 0.0
    %290 = vmatprep.subr.mxu0 0.0
    %291 = vmatpush2.msra.mxu0 0.0
    %292 = vmatprep.subr.mxu0 0.0
    %293 = vmatpush2.msra.mxu0 0.0
    %294 = vmatprep.subr.mxu0 0.0
    %295 = vmatpush2.msra.mxu0 0.0
    %296 = vmatprep.subr.mxu0 0.0
    %297 = vmatpush2.msra.mxu0 0.0
    %298 = vmatprep.subr.mxu0 0.0
    %299 = vmatpush2.msra.mxu0 0.0
    %300 = vmatprep.subr.mxu0 0.0
    %301 = vmatpush2.msra.mxu0 0.0
    %302 = vmatprep.subr.mxu0 0.0
    %303 = vmatpush2.msra.mxu0 0.0
    %304 = vmatprep.mubr.f32.mxu0 0.0
    %305 = vmatmul.mubr.f32.gmra.mxu0 %v238
    %v306 = vpop.f32.mrf.mxu0
    %v307 = vadd.f32 %v236, %v306
    %v308 = vpop.f32.mrf.mxu0
    %309 = vdwg.mxu0
    %v310 = vlaneseq
    %v311 = vand.u32 %v310, 127
    %vm312 = vcmp.lt.s32.totalorder %v311, 16
    %v313 = vxor.u32 %v307, 2147483648
    %v314 = vmul.f32 %v313, 1.442695
    %v315 = vpow.pop %v314
    %v316 = vadd.f32 %v315, 1.0
    %v317 = vrcp.pop %v316
    %v318 = vmul.f32 1.0, %v317
    %v319 = vsel %vm312, 1, 0
    %vm320 = vcmp.eq.s32.totalorder %v319, 1
    %v321 = vsel %vm320, %v307, %v318
    %vm322 = vcmask 146432
    %323 = vst.msk [vmem:[#allocation2] sm:$0xff] %vm322, %v321
    // Predicated region
    $region14: #{tpu_custom_call.1} parent=1 // pred_check
      _
    $region15: #{tpu_custom_call.1} parent=1 // pred_check_branch
      %325 = sbr.rel (0) target = $region17
    $region16: #{tpu_custom_call.1} parent=1 // pred_region
      %s327 = ssub.s32 128, 128
      %328 = vsyncadd [#allocation3], %s327
      %s330 = sshll.u32 [#allocation2], 4
      %s331 = int_to_ptr.vmem [resolvable:$true] %s330
      %333 = dma.vmem_to_hbm [thread:$0]  %s331, 128, %s3, [#allocation3]
    $region17: #{tpu_custom_call.1} parent=1 // pred_fallthru
      _
    // Predicated region
    $region18: #{tpu_custom_call.1} parent=1 // pred_check
      _
    $region19: #{tpu_custom_call.1} parent=1 // pred_check_branch
      %335 = sbr.rel (0) target = $region21
    $region20: #{tpu_custom_call.1} parent=1 // pred_region
      %336 = dma.done [#allocation3], 128
    $region21: #{tpu_custom_call.1} parent=1 // pred_fallthru
      _
    %337 = vsyncpa [#allocation3], 1

</llo_original>
